<compile_context>
chip_gen: v6e
topology: v6e:2x2x1
jax: 0.10.0
libtpu: 0.0.40
codegen_flags: <defaults>
</compile_context>

<pallas_src>
import jax
import jax.numpy as jnp
from jax.experimental import pallas as pl
from jax.experimental.pallas import tpu as pltpu


def _patch2feature_kernel(x_ref, o_ref):
    # x_ref: (p1*p2, c_blk, H, W)       -- all patches of one batch element (C-tile)
    # o_ref: (1, c_blk, p1, H, p2*W)    -- matching C-tile of the assembled map
    pp = x_ref.shape[0]
    p1 = o_ref.shape[2]
    p2 = pp // p1
    # Static unrolled loop over p1 row-blocks (p is small). For each row-block,
    # pack the p2 patches into the lane dimension with ONE concatenate and do
    # ONE full-slab (unmasked, lane-dense) store.
    for i in range(p1):
        row = jnp.concatenate(
            [x_ref[i * p2 + j] for j in range(p2)], axis=-1
        )  # (c_blk, H, p2*W)
        o_ref[0, :, i] = row


def patch2feature(x, num_patches):
    """x: (B*p*p, C, H, W)  ->  (B, C, p*H, p*W)  (p1 == p2 == num_patches)."""
    p = num_patches
    total, C, H, W = x.shape
    assert total % (p * p) == 0, "leading dim must be B * num_patches**2"
    B = total // (p * p)
    itemsize = jnp.dtype(x.dtype).itemsize

    # --- choose a channel tile so double-buffered (in + out) fits VMEM -------
    # Account for (8, 128) tile padding: W and p*W pad up to 128 lanes, H to 8
    # sublanes.  Budget ~10 MiB for one (in + out) copy => ~20 MiB double
    # buffered, under the explicit 32 MiB scoped limit on every generation
    # (v7x physical VMEM is only 64 MiB -> do not rely on v5e/v6e headroom).
    def _up(n, m):
        return ((n + m - 1) // m) * m

    in_bytes_per_c = p * p * _up(H, 8) * _up(W, 128) * itemsize
    out_bytes_per_c = p * _up(H, 8) * _up(p * W, 128) * itemsize
    budget = 10 * 1024 * 1024
    c_blk = max(1, min(C, budget // (in_bytes_per_c + out_bytes_per_c)))
    while C % c_blk:  # make it an exact divisor of C
        c_blk -= 1
    n_c = C // c_blk

    # Output declared as the free factorization (B, C, p1, H, p2*W); the final
    # reshape back to (B, C, p1*H, p2*W) is metadata-only (contiguous dims).
    out5 = pl.pallas_call(
        _patch2feature_kernel,
        out_shape=jax.ShapeDtypeStruct((B, C, p, H, p * W), x.dtype),
        grid_spec=pltpu.PrefetchScalarGridSpec(
            num_scalar_prefetch=0,
            grid=(B, n_c),  # leading axis B: even split across v7x's 2 TCs
            in_specs=[
                # All p*p patches of batch b (they are contiguous along axis 0),
                # channel tile ci.  Block index b along axis 0 -> element offset
                # b * (p*p), i.e. exactly patches (b, 0..p-1, 0..p-1).
                pl.BlockSpec((p * p, c_blk, H, W), lambda b, ci: (b, ci, 0, 0)),
            ],
            out_specs=pl.BlockSpec(
                # Lane-dense row blocks: last two dims are the FULL (H, p2*W).
                (1, c_blk, p, H, p * W),
                lambda b, ci: (b, ci, 0, 0, 0),
            ),
        ),
        compiler_params=pltpu.CompilerParams(
            dimension_semantics=("parallel", "parallel"),
            vmem_limit_bytes=32 * 1024 * 1024,
        ),
        cost_estimate=pl.CostEstimate(
            flops=0,
            transcendentals=0,
            bytes_accessed=2 * x.size * itemsize,  # pure-bandwidth op
        ),
    )(x)

    return out5.reshape(B, C, p * H, p * W)


def _reference(x, num_patches):
    p = num_patches
    total, C, H, W = x.shape
    B = total // (p * p)
    # '(B p1 p2) C H W -> B C (p1 H) (p2 W)'
    return (
        x.reshape(B, p, p, C, H, W)
        .transpose(0, 3, 1, 4, 2, 5)
        .reshape(B, C, p * H, p * W)
    )


if __name__ == "__main__":
    # Small deterministic example consistent with the module:
    #   num_patches = 2, B = 2, C = 4, H = W = 16  ->  input (8, 4, 16, 16)
    num_patches = 2
    B, C, H, W = 2, 4, 16, 16

    key = jax.random.PRNGKey(0)
    x = jax.random.normal(
        key, (B * num_patches * num_patches, C, H, W), dtype=jnp.float32
    )

    out = jax.block_until_ready(patch2feature(x, num_patches))

    ref = _reference(x, num_patches)
    assert out.shape == (B, C, num_patches * H, num_patches * W), out.shape
    assert jnp.array_equal(out, ref), "Pallas output mismatch vs reference"

    print("KERNEL_OK")
</pallas_src>

<mosaic_0001>
module attributes {stable_mosaic.version = 11 : i64} {
  func.func @_patch2feature_kernel(%arg0: i32, %arg1: i32, %arg2: memref<4x4x16x16xf32, #tpu.memory_space<vmem>>, %arg3: memref<1x4x2x16x32xf32, #tpu.memory_space<vmem>>) attributes {dimension_semantics = [#tpu.dimension_semantics<parallel>, #tpu.dimension_semantics<parallel>], iteration_bounds = array<i64: 2, 1>, scalar_prefetch = 0 : i64, scratch_operands = 0 : i64, tpu.core_type = #tpu.core_type<tc>, window_params = [{transform_indices = @transform_0, window_bounds = array<i64: 4, 4, 16, 16>}, {transform_indices = @transform_1, window_bounds = array<i64: 1, 4, 2, 16, 32>}]} {
    %c0 = arith.constant 0 : index
    %c0_0 = arith.constant 0 : index
    %c0_1 = arith.constant 0 : index
    %c0_2 = arith.constant 0 : index
    %0 = vector.load %arg2[%c0, %c0_0, %c0_1, %c0_2] : memref<4x4x16x16xf32, #tpu.memory_space<vmem>>, vector<1x4x16x16xf32>
    %1 = vector.shape_cast %0 : vector<1x4x16x16xf32> to vector<4x16x16xf32>
    %c1 = arith.constant 1 : index
    %c0_3 = arith.constant 0 : index
    %c0_4 = arith.constant 0 : index
    %c0_5 = arith.constant 0 : index
    %2 = vector.load %arg2[%c1, %c0_3, %c0_4, %c0_5] : memref<4x4x16x16xf32, #tpu.memory_space<vmem>>, vector<1x4x16x16xf32>
    %3 = vector.shape_cast %2 : vector<1x4x16x16xf32> to vector<4x16x16xf32>
    %4 = tpu.concatenate %1, %3 in 2 : vector<4x16x16xf32>, vector<4x16x16xf32> -> vector<4x16x32xf32>
    %c0_6 = arith.constant 0 : index
    %c0_7 = arith.constant 0 : index
    %c0_8 = arith.constant 0 : index
    %c0_9 = arith.constant 0 : index
    %c0_10 = arith.constant 0 : index
    %5 = vector.load %arg3[%c0_6, %c0_7, %c0_8, %c0_9, %c0_10] : memref<1x4x2x16x32xf32, #tpu.memory_space<vmem>>, vector<1x4x1x16x32xf32>
    %6 = vector.shape_cast %5 : vector<1x4x1x16x32xf32> to vector<4x16x32xf32>
    %7 = vector.shape_cast %4 : vector<4x16x32xf32> to vector<1x4x1x16x32xf32>
    tpu.vector_store %arg3[%c0_6, %c0_7, %c0_8, %c0_9, %c0_10], %7 {strides = array<i32>} : memref<1x4x2x16x32xf32, #tpu.memory_space<vmem>>, vector<1x4x1x16x32xf32>,
    %c2 = arith.constant 2 : index
    %c0_11 = arith.constant 0 : index
    %c0_12 = arith.constant 0 : index
    %c0_13 = arith.constant 0 : index
    %8 = vector.load %arg2[%c2, %c0_11, %c0_12, %c0_13] : memref<4x4x16x16xf32, #tpu.memory_space<vmem>>, vector<1x4x16x16xf32>
    %9 = vector.shape_cast %8 : vector<1x4x16x16xf32> to vector<4x16x16xf32>
    %c3 = arith.constant 3 : index
    %c0_14 = arith.constant 0 : index
    %c0_15 = arith.constant 0 : index
    %c0_16 = arith.constant 0 : index
    %10 = vector.load %arg2[%c3, %c0_14, %c0_15, %c0_16] : memref<4x4x16x16xf32, #tpu.memory_space<vmem>>, vector<1x4x16x16xf32>
    %11 = vector.shape_cast %10 : vector<1x4x16x16xf32> to vector<4x16x16xf32>
    %12 = tpu.concatenate %9, %11 in 2 : vector<4x16x16xf32>, vector<4x16x16xf32> -> vector<4x16x32xf32>
    %c0_17 = arith.constant 0 : index
    %c0_18 = arith.constant 0 : index
    %c1_19 = arith.constant 1 : index
    %c0_20 = arith.constant 0 : index
    %c0_21 = arith.constant 0 : index
    %13 = vector.load %arg3[%c0_17, %c0_18, %c1_19, %c0_20, %c0_21] : memref<1x4x2x16x32xf32, #tpu.memory_space<vmem>>, vector<1x4x1x16x32xf32>
    %14 = vector.shape_cast %13 : vector<1x4x1x16x32xf32> to vector<4x16x32xf32>
    %15 = vector.shape_cast %12 : vector<4x16x32xf32> to vector<1x4x1x16x32xf32>
    tpu.vector_store %arg3[%c0_17, %c0_18, %c1_19, %c0_20, %c0_21], %15 {strides = array<i32>} : memref<1x4x2x16x32xf32, #tpu.memory_space<vmem>>, vector<1x4x1x16x32xf32>,
    return
  }
  func.func @transform_0(%arg0: i32, %arg1: i32) -> (i32, i32, i32, i32) {
    %c0_i32 = arith.constant 0 : i32
    %c0_i32_0 = arith.constant 0 : i32
    %c0_i32_1 = arith.constant 0 : i32
    return %arg0, %arg1, %c0_i32, %c0_i32_0 : i32, i32, i32, i32
  }
  func.func @transform_1(%arg0: i32, %arg1: i32) -> (i32, i32, i32, i32, i32) {
    %c0_i32 = arith.constant 0 : i32
    %c0_i32_0 = arith.constant 0 : i32
    %c0_i32_1 = arith.constant 0 : i32
    %c0_i32_2 = arith.constant 0 : i32
    return %arg0, %arg1, %c0_i32, %c0_i32_0, %c0_i32_1 : i32, i32, i32, i32, i32
  }
}

</mosaic_0001>

<llo_original>
// kernel: tpu_custom_call.1
$region0: #{tpu_custom_call.1}
  #allocation0 [shape = 'u32[]', space=smem, size = 0x4, offset = 0x4, fixed_abs, tag = 'smem constant byte address 0x4 - core index']
  #allocation1 [shape = 'u32[144,128]{1,0:T(1,128)}', space=vmem, size = 0x12000, scoped, tag = 'internal scratch']
  %s0 = inlined_call_operand.hbm [shape: f32[8,4,16,16], index: 0, kind: input, shape index: {}]
  %s1 = inlined_call_operand.hbm [shape: f32[2,4,2,16,32], index: 1, kind: output, shape index: {}]
  %s2 = sld [smem:[#allocation0]]
  $region41: #{tpu_custom_call.1} parent=0
    _
  %s4 = ssub.s32 1, %s2
  %s5 = scalar_select 0, %s4, %s2
  $region1: #{tpu_custom_call.1} parent=0
    #allocation2 [shape = 'u8[262144]{0}', space=vmem, size = 0x40000, scoped, tag = 'input window, operand 0']
    #allocation3 [shape = 's32[2]{0}', space=sflag, size = 0x8, scoped, tag = 'scoped memory for tpu_custom_call.1']
    #allocation4 [shape = 's32[2]{0}', space=sflag, size = 0x8, scoped, tag = 'scoped memory for tpu_custom_call.1']
    #allocation5 [shape = 'u8[131072]{0}', space=vmem, size = 0x20000, scoped, tag = 'output window, operand 0']
    %6 = vsyncpa [#allocation3], 0
    %s7 = scalar_lea.sflag [#allocation3], 1
    %8 = vsyncpa %s7, 0
    %9 = vsyncpa [#allocation4], 0
    %s10 = scalar_lea.sflag [#allocation4], 1
    %11 = vsyncpa %s10, 0
    loop: start=0, step=1, limit=4
    $region2: #{tpu_custom_call.1} parent=1 // loop_pre_header
      _
    $region3: #{tpu_custom_call.1} parent=1 // loop_header
      %s13 = sphi 0, %s17
      %p14 = scmp.ge.s32.totalorder %s13, 4
      %s20 = sphi 0, %s32
      %s21 = sphi 0, %s28
      %s22 = sphi 0, %s20
      %s23 = sphi 0, %s21
      %s24 = sphi 0, %s22
      %s25 = sphi 0, %s23
      %s37 = sphi 0, %s39
      %s40 = sphi 0, %s37
      %s41 = sphi 0, %s40
      %s57 = sphi 0, %s41
      %s65 = sphi 0, %s67
      %s68 = sphi 0, %s65
      %s69 = sphi 0, %s68
      %s85 = sphi 0, %s69
    $region4: #{tpu_custom_call.1} parent=1 // loop_header_branch
      %16 = sbr.rel (%p14) target = $region8
    $region5: #{tpu_custom_call.1} parent=1 // loop_body
      %s18 = ssub.s32 %s13, 1
      %s19 = ssub.s32 %s13, 2
      %s26 = sadd.s32 1, %s21
      %p27 = scmp.ge.s32.totalorder %s26, 1
      %s28 = scalar_select %p27, 0, %s26
      %s29 = sadd.s32 1, %s20
      %s30 = scalar_select %p27, %s29, %s20
      %p31 = scmp.ge.s32.totalorder %s30, 2
      %s32 = scalar_select %p31, 0, %s30
      %s33 = ssub.s32 %s20, %s32
      %s34 = ssub.s32 %s21, %s28
      %s35 = sor.u32 %s33, %s34
      %p36 = scmp.eq.s32.totalorder %s35, 0
      %s38 = sadd.s32 %s37, 1
      %s39 = scalar_select %p36, %s37, %s38
      %p42 = pneg %p36
      %p43 = scmp.eq.s32.totalorder %s13, 1
      %p44 = por %p42, %p43
      %p45 = scmp.ne.s32.totalorder %s37, %s40
      %p46 = scmp.eq.s32.totalorder %s13, 0
      %p47 = por %p45, %p46
      %p48 = scmp.ne.s32.totalorder %s37, %s40
      %p49 = scmp.eq.s32.totalorder %s18, 1
      %p50 = por %p48, %p49
      %p51 = scmp.ne.s32.totalorder %s40, %s41
      %p52 = scmp.eq.s32.totalorder %s18, 0
      %p53 = por %p51, %p52
      %p54 = scmp.ne.s32.totalorder %s40, %s41
      %p55 = scmp.eq.s32.totalorder %s19, 1
      %p56 = por %p54, %p55
      %p58 = scmp.ne.s32.totalorder %s41, %s57
      %p59 = scmp.eq.s32.totalorder %s19, 0
      %p60 = por %p58, %p59
      %s61 = ssub.s32 %s20, %s32
      %s62 = ssub.s32 %s21, %s28
      %s63 = sor.u32 %s61, %s62
      %p64 = scmp.eq.s32.totalorder %s63, 0
      %s66 = sadd.s32 %s65, 1
      %s67 = scalar_select %p64, %s65, %s66
      %p70 = pneg %p64
      %p71 = scmp.eq.s32.totalorder %s13, 1
      %p72 = por %p70, %p71
      %p73 = scmp.ne.s32.totalorder %s65, %s68
      %p74 = scmp.eq.s32.totalorder %s13, 0
      %p75 = por %p73, %p74
      %p76 = scmp.ne.s32.totalorder %s65, %s68
      %p77 = scmp.eq.s32.totalorder %s18, 1
      %p78 = por %p76, %p77
      %p79 = scmp.ne.s32.totalorder %s68, %s69
      %p80 = scmp.eq.s32.totalorder %s18, 0
      %p81 = por %p79, %p80
      %p82 = scmp.ne.s32.totalorder %s68, %s69
      %p83 = scmp.eq.s32.totalorder %s19, 1
      %p84 = por %p82, %p83
      %p86 = scmp.ne.s32.totalorder %s69, %s85
      %p87 = scmp.eq.s32.totalorder %s19, 0
      %p88 = por %p86, %p87
      %p89 = scmp.le.s32.totalorder 1, %s13
      %p90 = scmp.lt.s32.totalorder %s13, 3
      %p91 = pnand %p89, %p90
      %p92 = pneg %p91
      // Predicated region
      $region9: #{tpu_custom_call.1} parent=5 // pred_check
        _
      $region10: #{tpu_custom_call.1} parent=5 // pred_check_branch
        %94 = sbr.rel (%p91) target = $region12
      $region11: #{tpu_custom_call.1} parent=5 // pred_region
        %s95 = ssub.s32 %s13, 1
      $region12: #{tpu_custom_call.1} parent=5 // pred_fallthru
        _
      %p96 = scmp.lt.s32.totalorder %s13, 2
      // Predicated region
      $region13: #{tpu_custom_call.1} parent=5 // pred_check
        %p97 = pneg %p96
      $region14: #{tpu_custom_call.1} parent=5 // pred_check_branch
        %99 = sbr.rel (%p97) target = $region16
      $region15: #{tpu_custom_call.1} parent=5 // pred_region
        // Predicated region
        $region17: #{tpu_custom_call.1} parent=15 // pred_check
          %p100 = pneg %p47
        $region18: #{tpu_custom_call.1} parent=15 // pred_check_branch
          %102 = sbr.rel (%p100) target = $region20
        $region19: #{tpu_custom_call.1} parent=15 // pred_region
          %s103 = sand.u32 %s37, 1
          %s104 = scalar_lea.sflag [#allocation3], %s103
          %s105 = sand.u32 %s37, 1
          %s106 = smul.addr %s105, 256
          %s107 = scalar_lea.vmem [#allocation2], %s106
          %s108 = smul.u32 4, %s20
          %s109 = smul.u32 4, %s21
          %s111 = ssub.s32 4096, 4096
          %112 = vsyncadd %s104, %s111
          %s113 = smul.addr %s109, 2
          %s114 = smul.addr %s108, 8
          %s115 = sadd.s32 %s113, %s114
          %s116 = smul.addr %s115, 128
          %s117 = scalar_lea.hbm %s0, %s116
          %s118 = sshll.u32 %s107, 4
          %s119 = int_to_ptr.vmem [resolvable:$true] %s118
          %124 = dma.hbm_to_vmem [thread:$0]  %s117, 4096, %s119, %s104, 128, 128, 8
        $region20: #{tpu_custom_call.1} parent=15 // pred_fallthru
          _
      $region16: #{tpu_custom_call.1} parent=5 // pred_fallthru
        _
      %p125 = scmp.le.s32.totalorder 1, %s13
      %p126 = scmp.lt.s32.totalorder %s13, 3
      %p127 = pnand %p125, %p126
      %p128 = pneg %p127
      // Predicated region
      $region21: #{tpu_custom_call.1} parent=5 // pred_check
        _
      $region22: #{tpu_custom_call.1} parent=5 // pred_check_branch
        %130 = sbr.rel (%p127) target = $region24
      $region23: #{tpu_custom_call.1} parent=5 // pred_region
        %s131 = ssub.s32 %s13, 1
        %s132 = sand.u32 %s40, 1
        %s133 = scalar_lea.sflag [#allocation3], %s132
        %s134 = sand.u32 %s40, 1
        %s135 = smul.addr %s134, 256
        %s136 = scalar_lea.vmem [#allocation2], %s135
        // Predicated region
        $region25: #{tpu_custom_call.1} parent=23 // pred_check
          %p137 = pneg %p53
        $region26: #{tpu_custom_call.1} parent=23 // pred_check_branch
          %139 = sbr.rel (%p137) target = $region28
        $region27: #{tpu_custom_call.1} parent=23 // pred_region
          %140 = dma.done %s133, 4096
        $region28: #{tpu_custom_call.1} parent=23 // pred_fallthru
          _
        %s141 = sand.u32 %s40, 1
        %s142 = scalar_lea.sflag [#allocation3], %s141
        %s143 = sand.u32 %s40, 1
        %s144 = smul.addr %s143, 256
        %s145 = scalar_lea.vmem [#allocation2], %s144
        %p146 = pneg %p53
        %p147 = pneg %p50
        %p148 = pneg %p81
        %p149 = pneg %p78
        %s150 = sand.u32 %s68, 1
        %s151 = scalar_lea.sflag [#allocation4], %s150
        %s152 = sand.u32 %s68, 1
        %s153 = smul.addr %s152, 128
        %s154 = scalar_lea.vmem [#allocation5], %s153
        %s155 = smul.u32 4, %s22
        %s156 = smul.u32 4, %s23
        %s157 = smul.u32 4, %s23
        %v158 = vld [vmem:[%s136] sm:$0xff]
        %v159 = vld [vmem:[%s136 + $0x8] sm:$0xff]
        %v160 = vld [vmem:[%s136 + $0x10] sm:$0xff]
        %v161 = vld [vmem:[%s136 + $0x18] sm:$0xff]
        %v162 = vld [vmem:[%s136 + $0x20] sm:$0xff]
        %v163 = vld [vmem:[%s136 + $0x28] sm:$0xff]
        %v164 = vld [vmem:[%s136 + $0x30] sm:$0xff]
        %v165 = vld [vmem:[%s136 + $0x38] sm:$0xff]
        %s166 = scalar_lea.vmem %s136, 64 [#allocation2]
        %v167 = vld [vmem:[%s166] sm:$0xff]
        %v168 = vld [vmem:[%s166 + $0x8] sm:$0xff]
        %v169 = vld [vmem:[%s166 + $0x10] sm:$0xff]
        %v170 = vld [vmem:[%s166 + $0x18] sm:$0xff]
        %v171 = vld [vmem:[%s166 + $0x20] sm:$0xff]
        %v172 = vld [vmem:[%s166 + $0x28] sm:$0xff]
        %v173 = vld [vmem:[%s166 + $0x30] sm:$0xff]
        %v174 = vld [vmem:[%s166 + $0x38] sm:$0xff]
        %183 = vrot.lane.b32.xlu0 %v167, 16
        %v184 = vpop.permute.xlu0 %183
        %185 = vrot.lane.b32.xlu0 %v168, 16
        %v186 = vpop.permute.xlu0 %185
        %187 = vrot.lane.b32.xlu0 %v169, 16
        %v188 = vpop.permute.xlu0 %187
        %189 = vrot.lane.b32.xlu0 %v170, 16
        %v190 = vpop.permute.xlu0 %189
        %191 = vrot.lane.b32.xlu0 %v171, 16
        %v192 = vpop.permute.xlu0 %191
        %193 = vrot.lane.b32.xlu0 %v172, 16
        %v194 = vpop.permute.xlu0 %193
        %195 = vrot.lane.b32.xlu0 %v173, 16
        %v196 = vpop.permute.xlu0 %195
        %197 = vrot.lane.b32.xlu0 %v174, 16
        %v198 = vpop.permute.xlu0 %197
        %vm207 = vcmask 130048
        %v208 = vsel %vm207, %v158, %v184
        %v209 = vsel %vm207, %v159, %v186
        %v210 = vsel %vm207, %v160, %v188
        %v211 = vsel %vm207, %v161, %v190
        %v212 = vsel %vm207, %v162, %v192
        %v213 = vsel %vm207, %v163, %v194
        %v214 = vsel %vm207, %v164, %v196
        %v215 = vsel %vm207, %v165, %v198
        %vm216 = vcmask 261120
        %217 = vst.msk [vmem:[%s154] sm:$0xff] %vm216, %v208
        %218 = vst.msk [vmem:[%s154 + $0x8] sm:$0xff] %vm216, %v209
        %219 = vst.msk [vmem:[%s154 + $0x20] sm:$0xff] %vm216, %v210
        %220 = vst.msk [vmem:[%s154 + $0x28] sm:$0xff] %vm216, %v211
        %221 = vst.msk [vmem:[%s154 + $0x40] sm:$0xff] %vm216, %v212
        %222 = vst.msk [vmem:[%s154 + $0x48] sm:$0xff] %vm216, %v213
        %223 = vst.msk [vmem:[%s154 + $0x60] sm:$0xff] %vm216, %v214
        %224 = vst.msk [vmem:[%s154 + $0x68] sm:$0xff] %vm216, %v215
        %s225 = scalar_lea.vmem %s136, 128 [#allocation2]
        %v226 = vld [vmem:[%s225] sm:$0xff]
        %v227 = vld [vmem:[%s225 + $0x8] sm:$0xff]
        %v228 = vld [vmem:[%s225 + $0x10] sm:$0xff]
        %v229 = vld [vmem:[%s225 + $0x18] sm:$0xff]
        %v230 = vld [vmem:[%s225 + $0x20] sm:$0xff]
        %v231 = vld [vmem:[%s225 + $0x28] sm:$0xff]
        %v232 = vld [vmem:[%s225 + $0x30] sm:$0xff]
        %v233 = vld [vmem:[%s225 + $0x38] sm:$0xff]
        %s234 = scalar_lea.vmem %s136, 192 [#allocation2]
        %v235 = vld [vmem:[%s234] sm:$0xff]
        %v236 = vld [vmem:[%s234 + $0x8] sm:$0xff]
        %v237 = vld [vmem:[%s234 + $0x10] sm:$0xff]
        %v238 = vld [vmem:[%s234 + $0x18] sm:$0xff]
        %v239 = vld [vmem:[%s234 + $0x20] sm:$0xff]
        %v240 = vld [vmem:[%s234 + $0x28] sm:$0xff]
        %v241 = vld [vmem:[%s234 + $0x30] sm:$0xff]
        %v242 = vld [vmem:[%s234 + $0x38] sm:$0xff]
        %251 = vrot.lane.b32.xlu0 %v235, 16
        %v252 = vpop.permute.xlu0 %251
        %253 = vrot.lane.b32.xlu0 %v236, 16
        %v254 = vpop.permute.xlu0 %253
        %255 = vrot.lane.b32.xlu0 %v237, 16
        %v256 = vpop.permute.xlu0 %255
        %257 = vrot.lane.b32.xlu0 %v238, 16
        %v258 = vpop.permute.xlu0 %257
        %259 = vrot.lane.b32.xlu0 %v239, 16
        %v260 = vpop.permute.xlu0 %259
        %261 = vrot.lane.b32.xlu0 %v240, 16
        %v262 = vpop.permute.xlu0 %261
        %263 = vrot.lane.b32.xlu0 %v241, 16
        %v264 = vpop.permute.xlu0 %263
        %265 = vrot.lane.b32.xlu0 %v242, 16
        %v266 = vpop.permute.xlu0 %265
        %v275 = vsel %vm207, %v226, %v252
        %v276 = vsel %vm207, %v227, %v254
        %v277 = vsel %vm207, %v228, %v256
        %v278 = vsel %vm207, %v229, %v258
        %v279 = vsel %vm207, %v230, %v260
        %v280 = vsel %vm207, %v231, %v262
        %v281 = vsel %vm207, %v232, %v264
        %v282 = vsel %vm207, %v233, %v266
        %s283 = scalar_lea.vmem %s154, 16 [#allocation5]
        %284 = vst.msk [vmem:[%s283] sm:$0xff] %vm216, %v275
        %285 = vst.msk [vmem:[%s283 + $0x8] sm:$0xff] %vm216, %v276
        %286 = vst.msk [vmem:[%s283 + $0x20] sm:$0xff] %vm216, %v277
        %287 = vst.msk [vmem:[%s283 + $0x28] sm:$0xff] %vm216, %v278
        %288 = vst.msk [vmem:[%s283 + $0x40] sm:$0xff] %vm216, %v279
        %289 = vst.msk [vmem:[%s283 + $0x48] sm:$0xff] %vm216, %v280
        %290 = vst.msk [vmem:[%s283 + $0x60] sm:$0xff] %vm216, %v281
        %291 = vst.msk [vmem:[%s283 + $0x68] sm:$0xff] %vm216, %v282
        %s292 = sand.u32 %s68, 1
        %s293 = scalar_lea.sflag [#allocation4], %s292
        %s294 = sand.u32 %s68, 1
        %s295 = smul.addr %s294, 128
        %s296 = scalar_lea.vmem [#allocation5], %s295
        // Predicated region
        $region29: #{tpu_custom_call.1} parent=23 // pred_check
          %p297 = pneg %p78
        $region30: #{tpu_custom_call.1} parent=23 // pred_check_branch
          %299 = sbr.rel (%p297) target = $region32
        $region31: #{tpu_custom_call.1} parent=23 // pred_region
          %s300 = smul.u32 4, %s23
          %s302 = ssub.s32 2048, 2048
          %303 = vsyncadd %s293, %s302
          %s304 = smul.addr %s300, 4
          %s305 = smul.addr %s22, 16
          %s306 = sadd.s32 %s304, %s305
          %s307 = smul.addr %s306, 128
          %s308 = scalar_lea.hbm %s1, %s307
          %s309 = sshll.u32 %s296, 4
          %s310 = int_to_ptr.vmem [resolvable:$true] %s309
          %315 = dma.vmem_to_hbm [thread:$0]  %s310, 2048, %s308, %s293, 128, 128, 8
        $region32: #{tpu_custom_call.1} parent=23 // pred_fallthru
          _
      $region24: #{tpu_custom_call.1} parent=5 // pred_fallthru
        _
      %p316 = scmp.le.s32.totalorder 2, %s13
      // Predicated region
      $region33: #{tpu_custom_call.1} parent=5 // pred_check
        %p317 = pneg %p316
      $region34: #{tpu_custom_call.1} parent=5 // pred_check_branch
        %319 = sbr.rel (%p317) target = $region36
      $region35: #{tpu_custom_call.1} parent=5 // pred_region
        %s320 = ssub.s32 %s13, 2
        // Predicated region
        $region37: #{tpu_custom_call.1} parent=35 // pred_check
          %p321 = pneg %p84
        $region38: #{tpu_custom_call.1} parent=35 // pred_check_branch
          %323 = sbr.rel (%p321) target = $region40
        $region39: #{tpu_custom_call.1} parent=35 // pred_region
          %s324 = sand.u32 %s69, 1
          %s325 = scalar_lea.sflag [#allocation4], %s324
          %s326 = sand.u32 %s69, 1
          %s327 = smul.addr %s326, 128
          %s328 = scalar_lea.vmem [#allocation5], %s327
          %329 = dma.done %s325, 2048
        $region40: #{tpu_custom_call.1} parent=35 // pred_fallthru
          _
      $region36: #{tpu_custom_call.1} parent=5 // pred_fallthru
        _
    $region6: #{tpu_custom_call.1} parent=1 // loop_footer
      %s17 = sadd.s32 1, %s13
    $region7: #{tpu_custom_call.1} parent=1 // loop_footer_branch
      %12 = sbr.rel target = $region3
    $region8: #{tpu_custom_call.1} parent=1 // loop_exit
      _
    %330 = vsyncpa [#allocation3], 1
    %s331 = scalar_lea.sflag [#allocation3], 1
    %332 = vsyncpa %s331, 1
    %333 = vsyncpa [#allocation4], 1
    %s334 = scalar_lea.sflag [#allocation4], 1
    %335 = vsyncpa %s334, 1

</llo_original>
